<compile_context>
chip_gen: v7x
topology: tpu7x:2x2x1
jax: 0.10.0
libtpu: 0.0.40
codegen_flags: <defaults>
</compile_context>

<pallas_src>
import jax
import jax.numpy as jnp
from jax.experimental import pallas as pl
from jax.experimental.pallas import tpu as pltpu

# (fan_in, fan_out) for encoder 3->128->64->32 and decoder 32->64->128->3.
_LAYER_DIMS = ((3, 128), (128, 64), (64, 32), (32, 64), (64, 128), (128, 3))
_LANE = 256      # lane-tile quantum: multiple of 128 (v5e MXU) and 256 (v6e/v7x)
_F_PAD = 8       # pad the 3-wide feature dims up to a full sublane group


def autoencoder_kernel(x_ref,
                       w1_ref, b1_ref, w2_ref, b2_ref, w3_ref, b3_ref,
                       w4_ref, b4_ref, w5_ref, b5_ref, w6_ref, b6_ref,
                       lat_ref, rec_ref):
    bf16 = jnp.bfloat16

    def layer(w_ref, b_ref, h_bf16, relu):
        # bf16 operands into the MXU, f32 accumulation; bias add stays in f32.
        y = jnp.dot(w_ref[...], h_bf16,
                    preferred_element_type=jnp.float32) + b_ref[...]
        if relu:
            # Cast hidden activations back to bf16 immediately: halves the
            # live (128, tile)/(64, tile) intermediates (VMEM/vreg pressure),
            # which is what bounds the lane tile size.
            return jnp.maximum(y, 0.0).astype(bf16)
        return y

    x = x_ref[...]                                    # (8, tile) bf16
    # encoder: 3(->8 zero-padded) -> 128 -> 64 -> 32
    h = layer(w1_ref, b1_ref, x, relu=True)
    h = layer(w2_ref, b2_ref, h, relu=True)
    lat = layer(w3_ref, b3_ref, h, relu=False)        # (32, tile) f32 accum
    lat_bf = lat.astype(bf16)
    lat_ref[...] = lat_bf                             # bf16 writeback
    # decoder: 32 -> 64 -> 128 -> 3(->8 zero-padded)
    d = layer(w4_ref, b4_ref, lat_bf, relu=True)
    d = layer(w5_ref, b5_ref, d, relu=True)
    rec = layer(w6_ref, b6_ref, d, relu=False)        # (8, tile) f32 accum
    rec_ref[...] = rec.astype(rec_ref.dtype)          # bf16 writeback


def _round_up(a, b):
    return ((a + b - 1) // b) * b


def autoencoder_forward(x, params, *, tile_n=8192):
    """x: (N, 3) float32. Returns (latent (N, 32), reconstructed (N, 3)) f32."""
    N, d_in = x.shape
    assert d_in == 3

    # Large lane tile (default 8192) amortizes the per-grid-step overhead; the
    # clamp keeps it N-aware (no whole padded tiles for small batches) and aims
    # for >= 2 grid steps so the 'parallel' axis can feed both v7x TensorCores.
    tile_cap = max(_round_up(tile_n, _LANE), _LANE)
    if N > 2 * _LANE:
        tile = min(tile_cap, _round_up(-(-N // 2), _LANE))
    else:
        tile = _LANE
    n_pad = _round_up(N, tile)
    grid = (n_pad // tile,)

    bf16 = jnp.bfloat16
    # Batch on the lane axis (feature-major); cast to bf16 *before* the
    # transpose so the host-side layout shuffle moves half the bytes.
    x_t = jnp.pad(x.astype(bf16), ((0, n_pad - N), (0, 0))).T       # (3, n_pad)
    x_t = jnp.pad(x_t, ((0, _F_PAD - 3), (0, 0)))                   # (8, n_pad)

    ws, bs = [], []
    for k, (fan_in, fan_out) in enumerate(_LAYER_DIMS, start=1):
        w = params[f"w{k}"].astype(bf16)            # (out, in)
        b = params[f"b{k}"]                         # (out, 1) f32
        # Zero-pad the degenerate 3-wide dims to 8: math is exact, layouts and
        # MXU shapes (K=8 / M=8) are friendlier.
        if fan_in == 3:
            w = jnp.pad(w, ((0, 0), (0, _F_PAD - 3)))
        if fan_out == 3:
            w = jnp.pad(w, ((0, _F_PAD - 3), (0, 0)))
            b = jnp.pad(b, ((0, _F_PAD - 3), (0, 0)))
        ws.append(w)
        bs.append(b)

    full = lambda a: pl.BlockSpec(a.shape, lambda i: (0, 0))
    lane_spec = lambda rows: pl.BlockSpec((rows, tile), lambda i: (0, i))

    in_specs = [lane_spec(_F_PAD)]
    flat_args = [x_t]
    for w, b in zip(ws, bs):
        in_specs += [full(w), full(b)]
        flat_args += [w, b]

    flops = 2 * n_pad * sum(i * o for i, o in _LAYER_DIMS)
    bytes_accessed = (x_t.size * 2 + n_pad * (32 + _F_PAD) * 2
                      + sum(w.size * 2 for w in ws)
                      + sum(b.size * 4 for b in bs))

    lat_t, rec_t = pl.pallas_call(
        autoencoder_kernel,
        out_shape=(jax.ShapeDtypeStruct((32, n_pad), bf16),
                   jax.ShapeDtypeStruct((_F_PAD, n_pad), bf16)),
        grid_spec=pltpu.PrefetchScalarGridSpec(
            num_scalar_prefetch=0,
            grid=grid,
            in_specs=in_specs,
            out_specs=(lane_spec(32), lane_spec(_F_PAD)),
        ),
        compiler_params=pltpu.CompilerParams(
            dimension_semantics=("parallel",),
            # Raise the scoped VMEM limit above the 16/32 MiB defaults so the
            # large lane tile fits; 48 MiB stays inside v7x's 64 MiB physical.
            vmem_limit_bytes=48 * 1024 * 1024),
        cost_estimate=pl.CostEstimate(
            flops=flops, transcendentals=0, bytes_accessed=bytes_accessed),
    )(*flat_args)

    # Transpose back to batch-major in bf16 (half the bytes of an f32
    # transpose), then cast to f32 to match the PyTorch module's output dtype.
    latent = lat_t[:, :N].T.astype(jnp.float32)
    recon = rec_t[:3, :N].T.astype(jnp.float32)
    return latent, recon


def init_params(key):
    """PyTorch nn.Linear-style init; weights stored (out, in), biases (out, 1)."""
    keys = jax.random.split(key, 2 * len(_LAYER_DIMS))
    params = {}
    for idx, (fan_in, fan_out) in enumerate(_LAYER_DIMS):
        bound = 1.0 / (fan_in ** 0.5)
        kw, kb = keys[2 * idx], keys[2 * idx + 1]
        params[f"w{idx + 1}"] = jax.random.uniform(
            kw, (fan_out, fan_in), jnp.float32, -bound, bound)
        params[f"b{idx + 1}"] = jax.random.uniform(
            kb, (fan_out, 1), jnp.float32, -bound, bound)
    return params


def autoencoder_reference(x, params):
    """Pure-JAX reference mirroring the kernel's bf16-operand / f32-accum math."""
    bf16 = jnp.bfloat16

    def layer(k, h, relu):
        w = params[f"w{k}"].astype(bf16)               # (out, in)
        b = params[f"b{k}"].reshape(1, -1)             # (1, out) f32
        y = jnp.dot(h.astype(bf16), w.T, preferred_element_type=jnp.float32) + b
        return jnp.maximum(y, 0.0).astype(bf16) if relu else y

    h = layer(1, x, True)
    h = layer(2, h, True)
    lat = layer(3, h, False).astype(bf16)    # kernel stores latent as bf16
    d = layer(4, lat, True)
    d = layer(5, d, True)
    rec = layer(6, d, False).astype(bf16)    # kernel stores recon as bf16
    return lat.astype(jnp.float32), rec.astype(jnp.float32)


if __name__ == "__main__":
    key = jax.random.PRNGKey(0)
    k_params, k_x = jax.random.split(key)
    params = init_params(k_params)

    N = 200  # deliberately ragged: exercises the lane-padding / single-step path
    x = jax.random.normal(k_x, (N, 3), jnp.float32)

    latent, recon = autoencoder_forward(x, params)
    latent, recon = jax.block_until_ready((latent, recon))

    lat_ref, rec_ref = autoencoder_reference(x, params)
    assert latent.shape == (N, 32) and recon.shape == (N, 3)
    assert jnp.allclose(latent, lat_ref, atol=2e-2, rtol=2e-2)
    assert jnp.allclose(recon, rec_ref, atol=2e-2, rtol=2e-2)

    print("KERNEL_OK")
</pallas_src>

<mosaic_0001>
module attributes {stable_mosaic.version = 11 : i64} {
  func.func @autoencoder_kernel(%arg0: i32, %arg1: memref<8x256xbf16, #tpu.memory_space<vmem>>, %arg2: memref<128x8xbf16, #tpu.memory_space<vmem>>, %arg3: memref<128x1xf32, #tpu.memory_space<vmem>>, %arg4: memref<64x128xbf16, #tpu.memory_space<vmem>>, %arg5: memref<64x1xf32, #tpu.memory_space<vmem>>, %arg6: memref<32x64xbf16, #tpu.memory_space<vmem>>, %arg7: memref<32x1xf32, #tpu.memory_space<vmem>>, %arg8: memref<64x32xbf16, #tpu.memory_space<vmem>>, %arg9: memref<64x1xf32, #tpu.memory_space<vmem>>, %arg10: memref<128x64xbf16, #tpu.memory_space<vmem>>, %arg11: memref<128x1xf32, #tpu.memory_space<vmem>>, %arg12: memref<8x128xbf16, #tpu.memory_space<vmem>>, %arg13: memref<8x1xf32, #tpu.memory_space<vmem>>, %arg14: memref<32x256xbf16, #tpu.memory_space<vmem>>, %arg15: memref<8x256xbf16, #tpu.memory_space<vmem>>) attributes {dimension_semantics = [#tpu.dimension_semantics<parallel>], iteration_bounds = array<i64: 1>, scalar_prefetch = 0 : i64, scratch_operands = 0 : i64, tpu.core_type = #tpu.core_type<tc>, window_params = [{transform_indices = @transform_0, window_bounds = array<i64: 8, 256>}, {pipeline_mode = #tpu.pipeline_mode<synchronous>, transform_indices = @transform_1, window_bounds = array<i64: 128, 8>}, {pipeline_mode = #tpu.pipeline_mode<synchronous>, transform_indices = @transform_2, window_bounds = array<i64: 128, 1>}, {pipeline_mode = #tpu.pipeline_mode<synchronous>, transform_indices = @transform_3, window_bounds = array<i64: 64, 128>}, {pipeline_mode = #tpu.pipeline_mode<synchronous>, transform_indices = @transform_4, window_bounds = array<i64: 64, 1>}, {pipeline_mode = #tpu.pipeline_mode<synchronous>, transform_indices = @transform_5, window_bounds = array<i64: 32, 64>}, {pipeline_mode = #tpu.pipeline_mode<synchronous>, transform_indices = @transform_6, window_bounds = array<i64: 32, 1>}, {pipeline_mode = #tpu.pipeline_mode<synchronous>, transform_indices = @transform_7, window_bounds = array<i64: 64, 32>}, {pipeline_mode = #tpu.pipeline_mode<synchronous>, transform_indices = @transform_8, window_bounds = array<i64: 64, 1>}, {pipeline_mode = #tpu.pipeline_mode<synchronous>, transform_indices = @transform_9, window_bounds = array<i64: 128, 64>}, {pipeline_mode = #tpu.pipeline_mode<synchronous>, transform_indices = @transform_10, window_bounds = array<i64: 128, 1>}, {pipeline_mode = #tpu.pipeline_mode<synchronous>, transform_indices = @transform_11, window_bounds = array<i64: 8, 128>}, {pipeline_mode = #tpu.pipeline_mode<synchronous>, transform_indices = @transform_12, window_bounds = array<i64: 8, 1>}, {transform_indices = @transform_13, window_bounds = array<i64: 32, 256>}, {transform_indices = @transform_14, window_bounds = array<i64: 8, 256>}]} {
    %c0 = arith.constant 0 : index
    %c0_0 = arith.constant 0 : index
    %0 = vector.load %arg1[%c0, %c0_0] : memref<8x256xbf16, #tpu.memory_space<vmem>>, vector<8x256xbf16>
    %c0_1 = arith.constant 0 : index
    %c0_2 = arith.constant 0 : index
    %1 = vector.load %arg2[%c0_1, %c0_2] : memref<128x8xbf16, #tpu.memory_space<vmem>>, vector<128x8xbf16>
    %cst = arith.constant dense<0.000000e+00> : vector<128x256xf32>
    %2 = tpu.matmul %1, %0, %cst {dimension_numbers = #tpu.dot_dimension_numbers<[1], [0], [0], [1], [0, 0, 1, 1], [], []>} : vector<128x8xbf16>, vector<8x256xbf16>, vector<128x256xf32> -> vector<128x256xf32>
    %c0_3 = arith.constant 0 : index
    %c0_4 = arith.constant 0 : index
    %3 = vector.load %arg3[%c0_3, %c0_4] : memref<128x1xf32, #tpu.memory_space<vmem>>, vector<128x1xf32>
    %4 = vector.broadcast %3 : vector<128x1xf32> to vector<128x256xf32>
    %5 = arith.addf %2, %4 : vector<128x256xf32>
    %cst_5 = arith.constant 0.000000e+00 : f32
    %6 = vector.broadcast %cst_5 : f32 to vector<128x256xf32>
    %7 = arith.maximumf %5, %6 : vector<128x256xf32>
    %8 = arith.truncf %7 : vector<128x256xf32> to vector<128x256xbf16>
    %c0_6 = arith.constant 0 : index
    %c0_7 = arith.constant 0 : index
    %9 = vector.load %arg4[%c0_6, %c0_7] : memref<64x128xbf16, #tpu.memory_space<vmem>>, vector<64x128xbf16>
    %cst_8 = arith.constant dense<0.000000e+00> : vector<64x256xf32>
    %10 = tpu.matmul %9, %8, %cst_8 {dimension_numbers = #tpu.dot_dimension_numbers<[1], [0], [0], [1], [0, 0, 1, 1], [], []>} : vector<64x128xbf16>, vector<128x256xbf16>, vector<64x256xf32> -> vector<64x256xf32>
    %c0_9 = arith.constant 0 : index
    %c0_10 = arith.constant 0 : index
    %11 = vector.load %arg5[%c0_9, %c0_10] : memref<64x1xf32, #tpu.memory_space<vmem>>, vector<64x1xf32>
    %12 = vector.broadcast %11 : vector<64x1xf32> to vector<64x256xf32>
    %13 = arith.addf %10, %12 : vector<64x256xf32>
    %cst_11 = arith.constant 0.000000e+00 : f32
    %14 = vector.broadcast %cst_11 : f32 to vector<64x256xf32>
    %15 = arith.maximumf %13, %14 : vector<64x256xf32>
    %16 = arith.truncf %15 : vector<64x256xf32> to vector<64x256xbf16>
    %c0_12 = arith.constant 0 : index
    %c0_13 = arith.constant 0 : index
    %17 = vector.load %arg6[%c0_12, %c0_13] : memref<32x64xbf16, #tpu.memory_space<vmem>>, vector<32x64xbf16>
    %cst_14 = arith.constant dense<0.000000e+00> : vector<32x256xf32>
    %18 = tpu.matmul %17, %16, %cst_14 {dimension_numbers = #tpu.dot_dimension_numbers<[1], [0], [0], [1], [0, 0, 1, 1], [], []>} : vector<32x64xbf16>, vector<64x256xbf16>, vector<32x256xf32> -> vector<32x256xf32>
    %c0_15 = arith.constant 0 : index
    %c0_16 = arith.constant 0 : index
    %19 = vector.load %arg7[%c0_15, %c0_16] : memref<32x1xf32, #tpu.memory_space<vmem>>, vector<32x1xf32>
    %20 = vector.broadcast %19 : vector<32x1xf32> to vector<32x256xf32>
    %21 = arith.addf %18, %20 : vector<32x256xf32>
    %22 = arith.truncf %21 : vector<32x256xf32> to vector<32x256xbf16>
    %c0_17 = arith.constant 0 : index
    %c0_18 = arith.constant 0 : index
    %23 = vector.load %arg14[%c0_17, %c0_18] : memref<32x256xbf16, #tpu.memory_space<vmem>>, vector<32x256xbf16>
    tpu.vector_store %arg14[%c0_17, %c0_18], %22 {strides = array<i32>} : memref<32x256xbf16, #tpu.memory_space<vmem>>, vector<32x256xbf16>,
    %c0_19 = arith.constant 0 : index
    %c0_20 = arith.constant 0 : index
    %24 = vector.load %arg8[%c0_19, %c0_20] : memref<64x32xbf16, #tpu.memory_space<vmem>>, vector<64x32xbf16>
    %cst_21 = arith.constant dense<0.000000e+00> : vector<64x256xf32>
    %25 = tpu.matmul %24, %22, %cst_21 {dimension_numbers = #tpu.dot_dimension_numbers<[1], [0], [0], [1], [0, 0, 1, 1], [], []>} : vector<64x32xbf16>, vector<32x256xbf16>, vector<64x256xf32> -> vector<64x256xf32>
    %c0_22 = arith.constant 0 : index
    %c0_23 = arith.constant 0 : index
    %26 = vector.load %arg9[%c0_22, %c0_23] : memref<64x1xf32, #tpu.memory_space<vmem>>, vector<64x1xf32>
    %27 = vector.broadcast %26 : vector<64x1xf32> to vector<64x256xf32>
    %28 = arith.addf %25, %27 : vector<64x256xf32>
    %cst_24 = arith.constant 0.000000e+00 : f32
    %29 = vector.broadcast %cst_24 : f32 to vector<64x256xf32>
    %30 = arith.maximumf %28, %29 : vector<64x256xf32>
    %31 = arith.truncf %30 : vector<64x256xf32> to vector<64x256xbf16>
    %c0_25 = arith.constant 0 : index
    %c0_26 = arith.constant 0 : index
    %32 = vector.load %arg10[%c0_25, %c0_26] : memref<128x64xbf16, #tpu.memory_space<vmem>>, vector<128x64xbf16>
    %cst_27 = arith.constant dense<0.000000e+00> : vector<128x256xf32>
    %33 = tpu.matmul %32, %31, %cst_27 {dimension_numbers = #tpu.dot_dimension_numbers<[1], [0], [0], [1], [0, 0, 1, 1], [], []>} : vector<128x64xbf16>, vector<64x256xbf16>, vector<128x256xf32> -> vector<128x256xf32>
    %c0_28 = arith.constant 0 : index
    %c0_29 = arith.constant 0 : index
    %34 = vector.load %arg11[%c0_28, %c0_29] : memref<128x1xf32, #tpu.memory_space<vmem>>, vector<128x1xf32>
    %35 = vector.broadcast %34 : vector<128x1xf32> to vector<128x256xf32>
    %36 = arith.addf %33, %35 : vector<128x256xf32>
    %cst_30 = arith.constant 0.000000e+00 : f32
    %37 = vector.broadcast %cst_30 : f32 to vector<128x256xf32>
    %38 = arith.maximumf %36, %37 : vector<128x256xf32>
    %39 = arith.truncf %38 : vector<128x256xf32> to vector<128x256xbf16>
    %c0_31 = arith.constant 0 : index
    %c0_32 = arith.constant 0 : index
    %40 = vector.load %arg12[%c0_31, %c0_32] : memref<8x128xbf16, #tpu.memory_space<vmem>>, vector<8x128xbf16>
    %cst_33 = arith.constant dense<0.000000e+00> : vector<8x256xf32>
    %41 = tpu.matmul %40, %39, %cst_33 {dimension_numbers = #tpu.dot_dimension_numbers<[1], [0], [0], [1], [0, 0, 1, 1], [], []>} : vector<8x128xbf16>, vector<128x256xbf16>, vector<8x256xf32> -> vector<8x256xf32>
    %c0_34 = arith.constant 0 : index
    %c0_35 = arith.constant 0 : index
    %42 = vector.load %arg13[%c0_34, %c0_35] : memref<8x1xf32, #tpu.memory_space<vmem>>, vector<8x1xf32>
    %43 = vector.broadcast %42 : vector<8x1xf32> to vector<8x256xf32>
    %44 = arith.addf %41, %43 : vector<8x256xf32>
    %45 = arith.truncf %44 : vector<8x256xf32> to vector<8x256xbf16>
    %c0_36 = arith.constant 0 : index
    %c0_37 = arith.constant 0 : index
    %46 = vector.load %arg15[%c0_36, %c0_37] : memref<8x256xbf16, #tpu.memory_space<vmem>>, vector<8x256xbf16>
    tpu.vector_store %arg15[%c0_36, %c0_37], %45 {strides = array<i32>} : memref<8x256xbf16, #tpu.memory_space<vmem>>, vector<8x256xbf16>,
    return
  }
  func.func @transform_0(%arg0: i32) -> (i32, i32) {
    %c0_i32 = arith.constant 0 : i32
    %c0_i32_0 = arith.constant 0 : i32
    return %c0_i32, %arg0 : i32, i32
  }
  func.func @transform_1(%arg0: i32) -> (i32, i32) {
    %c0_i32 = arith.constant 0 : i32
    %c0_i32_0 = arith.constant 0 : i32
    %c0_i32_1 = arith.constant 0 : i32
    return %c0_i32, %c0_i32_0 : i32, i32
  }
  func.func @transform_2(%arg0: i32) -> (i32, i32) {
    %c0_i32 = arith.constant 0 : i32
    %c0_i32_0 = arith.constant 0 : i32
    %c0_i32_1 = arith.constant 0 : i32
    return %c0_i32, %c0_i32_0 : i32, i32
  }
  func.func @transform_3(%arg0: i32) -> (i32, i32) {
    %c0_i32 = arith.constant 0 : i32
    %c0_i32_0 = arith.constant 0 : i32
    %c0_i32_1 = arith.constant 0 : i32
    return %c0_i32, %c0_i32_0 : i32, i32
  }
  func.func @transform_4(%arg0: i32) -> (i32, i32) {
    %c0_i32 = arith.constant 0 : i32
    %c0_i32_0 = arith.constant 0 : i32
    %c0_i32_1 = arith.constant 0 : i32
    return %c0_i32, %c0_i32_0 : i32, i32
  }
  func.func @transform_5(%arg0: i32) -> (i32, i32) {
    %c0_i32 = arith.constant 0 : i32
    %c0_i32_0 = arith.constant 0 : i32
    %c0_i32_1 = arith.constant 0 : i32
    return %c0_i32, %c0_i32_0 : i32, i32
  }
  func.func @transform_6(%arg0: i32) -> (i32, i32) {
    %c0_i32 = arith.constant 0 : i32
    %c0_i32_0 = arith.constant 0 : i32
    %c0_i32_1 = arith.constant 0 : i32
    return %c0_i32, %c0_i32_0 : i32, i32
  }
  func.func @transform_7(%arg0: i32) -> (i32, i32) {
    %c0_i32 = arith.constant 0 : i32
    %c0_i32_0 = arith.constant 0 : i32
    %c0_i32_1 = arith.constant 0 : i32
    return %c0_i32, %c0_i32_0 : i32, i32
  }
  func.func @transform_8(%arg0: i32) -> (i32, i32) {
    %c0_i32 = arith.constant 0 : i32
    %c0_i32_0 = arith.constant 0 : i32
    %c0_i32_1 = arith.constant 0 : i32
    return %c0_i32, %c0_i32_0 : i32, i32
  }
  func.func @transform_9(%arg0: i32) -> (i32, i32) {
    %c0_i32 = arith.constant 0 : i32
    %c0_i32_0 = arith.constant 0 : i32
    %c0_i32_1 = arith.constant 0 : i32
    return %c0_i32, %c0_i32_0 : i32, i32
  }
  func.func @transform_10(%arg0: i32) -> (i32, i32) {
    %c0_i32 = arith.constant 0 : i32
    %c0_i32_0 = arith.constant 0 : i32
    %c0_i32_1 = arith.constant 0 : i32
    return %c0_i32, %c0_i32_0 : i32, i32
  }
  func.func @transform_11(%arg0: i32) -> (i32, i32) {
    %c0_i32 = arith.constant 0 : i32
    %c0_i32_0 = arith.constant 0 : i32
    %c0_i32_1 = arith.constant 0 : i32
    return %c0_i32, %c0_i32_0 : i32, i32
  }
  func.func @transform_12(%arg0: i32) -> (i32, i32) {
    %c0_i32 = arith.constant 0 : i32
    %c0_i32_0 = arith.constant 0 : i32
    %c0_i32_1 = arith.constant 0 : i32
    return %c0_i32, %c0_i32_0 : i32, i32
  }
  func.func @transform_13(%arg0: i32) -> (i32, i32) {
    %c0_i32 = arith.constant 0 : i32
    %c0_i32_0 = arith.constant 0 : i32
    return %c0_i32, %arg0 : i32, i32
  }
  func.func @transform_14(%arg0: i32) -> (i32, i32) {
    %c0_i32 = arith.constant 0 : i32
    %c0_i32_0 = arith.constant 0 : i32
    return %c0_i32, %arg0 : i32, i32
  }
}

</mosaic_0001>

<llo_original>
// kernel: tpu_custom_call.1
$region0: #{tpu_custom_call.1}
  #allocation0 [shape = 'u32[]', space=smem, size = 0x4, offset = 0x4, fixed_abs, tag = 'smem constant byte address 0x4 - core index']
  #allocation1 [shape = 'u32[144,128]{1,0:T(1,128)}', space=vmem, size = 0x12000, scoped, tag = 'internal scratch']
  %s0 = inlined_call_operand.vmem [shape: bf16[8,256], index: 0, kind: input, shape index: {}]
  %s1 = inlined_call_operand.vmem [shape: bf16[128,8], index: 1, kind: input, shape index: {}]
  %s2 = inlined_call_operand.vmem [shape: f32[128,1], index: 2, kind: input, shape index: {}]
  %s3 = inlined_call_operand.vmem [shape: bf16[64,128], index: 3, kind: input, shape index: {}]
  %s4 = inlined_call_operand.vmem [shape: f32[64,1], index: 4, kind: input, shape index: {}]
  %s5 = inlined_call_operand.vmem [shape: bf16[32,64], index: 5, kind: input, shape index: {}]
  %s6 = inlined_call_operand.vmem [shape: f32[32,1], index: 6, kind: input, shape index: {}]
  %s7 = inlined_call_operand.vmem [shape: bf16[64,32], index: 7, kind: input, shape index: {}]
  %s8 = inlined_call_operand.vmem [shape: f32[64,1], index: 8, kind: input, shape index: {}]
  %s9 = inlined_call_operand.vmem [shape: bf16[128,64], index: 9, kind: input, shape index: {}]
  %s10 = inlined_call_operand.vmem [shape: f32[128,1], index: 10, kind: input, shape index: {}]
  %s11 = inlined_call_operand.vmem [shape: bf16[8,128], index: 11, kind: input, shape index: {}]
  %s12 = inlined_call_operand.vmem [shape: f32[8,1], index: 12, kind: input, shape index: {}]
  %s13 = inlined_call_operand.hbm [shape: bf16[32,256], index: 13, kind: output, shape index: {0}]
  %s14 = inlined_call_operand.hbm [shape: bf16[8,256], index: 14, kind: output, shape index: {1}]
  %15 = xla_tuple %s13, %s14
  %s16 = sld [smem:[#allocation0]]
  $region70: #{tpu_custom_call.1} parent=0
    _
  %s18 = ssub.s32 1, %s16
  %s19 = scalar_select 0, %s18, %s16
  $region1: #{tpu_custom_call.1} parent=0
    #allocation2 [shape = 'u8[16384]{0}', space=vmem, size = 0x4000, scoped, tag = 'output window, operand 0, single buffered']
    #allocation3 [shape = 's32[1]{0}', space=sflag, size = 0x4, scoped, tag = 'scoped memory for tpu_custom_call.1']
    #allocation4 [shape = 'u8[4096]{0}', space=vmem, size = 0x1000, scoped, tag = 'output window, operand 1, single buffered']
    #allocation5 [shape = 's32[1]{0}', space=sflag, size = 0x4, scoped, tag = 'scoped memory for tpu_custom_call.1']
    %20 = vsyncpa [#allocation3], 0
    %21 = vsyncpa [#allocation5], 0
    // Predicated region
    $region2: #{tpu_custom_call.1} parent=1 // pred_check
      _
    $region3: #{tpu_custom_call.1} parent=1 // pred_check_branch
      %23 = sbr.rel (0) target = $region5
    $region4: #{tpu_custom_call.1} parent=1 // pred_region
      _
    $region5: #{tpu_custom_call.1} parent=1 // pred_fallthru
      _
    // Predicated region
    $region6: #{tpu_custom_call.1} parent=1 // pred_check
      _
    $region7: #{tpu_custom_call.1} parent=1 // pred_check_branch
      %25 = sbr.rel (0) target = $region9
    $region8: #{tpu_custom_call.1} parent=1 // pred_region
      _
    $region9: #{tpu_custom_call.1} parent=1 // pred_fallthru
      _
    // Predicated region
    $region10: #{tpu_custom_call.1} parent=1 // pred_check
      _
    $region11: #{tpu_custom_call.1} parent=1 // pred_check_branch
      %27 = sbr.rel (0) target = $region13
    $region12: #{tpu_custom_call.1} parent=1 // pred_region
      _
    $region13: #{tpu_custom_call.1} parent=1 // pred_fallthru
      _
    // Predicated region
    $region14: #{tpu_custom_call.1} parent=1 // pred_check
      _
    $region15: #{tpu_custom_call.1} parent=1 // pred_check_branch
      %29 = sbr.rel (0) target = $region17
    $region16: #{tpu_custom_call.1} parent=1 // pred_region
      _
    $region17: #{tpu_custom_call.1} parent=1 // pred_fallthru
      _
    // Predicated region
    $region18: #{tpu_custom_call.1} parent=1 // pred_check
      _
    $region19: #{tpu_custom_call.1} parent=1 // pred_check_branch
      %31 = sbr.rel (0) target = $region21
    $region20: #{tpu_custom_call.1} parent=1 // pred_region
      _
    $region21: #{tpu_custom_call.1} parent=1 // pred_fallthru
      _
    // Predicated region
    $region22: #{tpu_custom_call.1} parent=1 // pred_check
      _
    $region23: #{tpu_custom_call.1} parent=1 // pred_check_branch
      %33 = sbr.rel (0) target = $region25
    $region24: #{tpu_custom_call.1} parent=1 // pred_region
      _
    $region25: #{tpu_custom_call.1} parent=1 // pred_fallthru
      _
    // Predicated region
    $region26: #{tpu_custom_call.1} parent=1 // pred_check
      _
    $region27: #{tpu_custom_call.1} parent=1 // pred_check_branch
      %35 = sbr.rel (0) target = $region29
    $region28: #{tpu_custom_call.1} parent=1 // pred_region
      _
    $region29: #{tpu_custom_call.1} parent=1 // pred_fallthru
      _
    // Predicated region
    $region30: #{tpu_custom_call.1} parent=1 // pred_check
      _
    $region31: #{tpu_custom_call.1} parent=1 // pred_check_branch
      %37 = sbr.rel (0) target = $region33
    $region32: #{tpu_custom_call.1} parent=1 // pred_region
      _
    $region33: #{tpu_custom_call.1} parent=1 // pred_fallthru
      _
    // Predicated region
    $region34: #{tpu_custom_call.1} parent=1 // pred_check
      _
    $region35: #{tpu_custom_call.1} parent=1 // pred_check_branch
      %39 = sbr.rel (0) target = $region37
    $region36: #{tpu_custom_call.1} parent=1 // pred_region
      _
    $region37: #{tpu_custom_call.1} parent=1 // pred_fallthru
      _
    // Predicated region
    $region38: #{tpu_custom_call.1} parent=1 // pred_check
      _
    $region39: #{tpu_custom_call.1} parent=1 // pred_check_branch
      %41 = sbr.rel (0) target = $region41
    $region40: #{tpu_custom_call.1} parent=1 // pred_region
      _
    $region41: #{tpu_custom_call.1} parent=1 // pred_fallthru
      _
    // Predicated region
    $region42: #{tpu_custom_call.1} parent=1 // pred_check
      _
    $region43: #{tpu_custom_call.1} parent=1 // pred_check_branch
      %43 = sbr.rel (0) target = $region45
    $region44: #{tpu_custom_call.1} parent=1 // pred_region
      _
    $region45: #{tpu_custom_call.1} parent=1 // pred_fallthru
      _
    // Predicated region
    $region46: #{tpu_custom_call.1} parent=1 // pred_check
      _
    $region47: #{tpu_custom_call.1} parent=1 // pred_check_branch
      %45 = sbr.rel (0) target = $region49
    $region48: #{tpu_custom_call.1} parent=1 // pred_region
      _
    $region49: #{tpu_custom_call.1} parent=1 // pred_fallthru
      _
    // Predicated region
    $region50: #{tpu_custom_call.1} parent=1 // pred_check
      _
    $region51: #{tpu_custom_call.1} parent=1 // pred_check_branch
      %47 = sbr.rel (0) target = $region53
    $region52: #{tpu_custom_call.1} parent=1 // pred_region
      _
    $region53: #{tpu_custom_call.1} parent=1 // pred_fallthru
      _
    %v49 = vld [vmem:[%s0] sm:$0xff]
    %v50 = vld [vmem:[%s1] sm:$0xf]
    %v51 = vld [vmem:[%s1 + $0x4] sm:$0xf]
    %v52 = vld [vmem:[%s1 + $0x8] sm:$0xf]
    %v53 = vld [vmem:[%s1 + $0xc] sm:$0xf]
    %v54 = vld [vmem:[%s1 + $0x10] sm:$0xf]
    %v55 = vld [vmem:[%s1 + $0x14] sm:$0xf]
    %v56 = vld [vmem:[%s1 + $0x18] sm:$0xf]
    %v57 = vld [vmem:[%s1 + $0x1c] sm:$0xf]
    %v58 = vld [vmem:[%s1 + $0x20] sm:$0xf]
    %v59 = vld [vmem:[%s1 + $0x24] sm:$0xf]
    %v60 = vld [vmem:[%s1 + $0x28] sm:$0xf]
    %v61 = vld [vmem:[%s1 + $0x2c] sm:$0xf]
    %v62 = vld [vmem:[%s1 + $0x30] sm:$0xf]
    %v63 = vld [vmem:[%s1 + $0x34] sm:$0xf]
    %v64 = vld [vmem:[%s1 + $0x38] sm:$0xf]
    %v65 = vld [vmem:[%s1 + $0x3c] sm:$0xf]
    %v66 = vld [vmem:[%s2] sm:$0xff]
    %v67 = vld [vmem:[%s2 + $0x8] sm:$0xff]
    %v68 = vld [vmem:[%s2 + $0x10] sm:$0xff]
    %v69 = vld [vmem:[%s2 + $0x18] sm:$0xff]
    %v70 = vld [vmem:[%s2 + $0x20] sm:$0xff]
    %v71 = vld [vmem:[%s2 + $0x28] sm:$0xff]
    %v72 = vld [vmem:[%s2 + $0x30] sm:$0xff]
    %v73 = vld [vmem:[%s2 + $0x38] sm:$0xff]
    %v74 = vld [vmem:[%s2 + $0x40] sm:$0xff]
    %v75 = vld [vmem:[%s2 + $0x48] sm:$0xff]
    %v76 = vld [vmem:[%s2 + $0x50] sm:$0xff]
    %v77 = vld [vmem:[%s2 + $0x58] sm:$0xff]
    %v78 = vld [vmem:[%s2 + $0x60] sm:$0xff]
    %v79 = vld [vmem:[%s2 + $0x68] sm:$0xff]
    %v80 = vld [vmem:[%s2 + $0x70] sm:$0xff]
    %v81 = vld [vmem:[%s2 + $0x78] sm:$0xff]
    %83 = vset.pattern.permute.xlu0 0
    %84 = vperm.xlu0 %83, %v66
    %v85 = vpop.permute.xlu0 %84
    %88 = vset.pattern.permute.xlu0 0
    %89 = vperm.xlu0 %88, %v67
    %v90 = vpop.permute.xlu0 %89
    %93 = vset.pattern.permute.xlu0 0
    %94 = vperm.xlu0 %93, %v68
    %v95 = vpop.permute.xlu0 %94
    %98 = vset.pattern.permute.xlu0 0
    %99 = vperm.xlu0 %98, %v69
    %v100 = vpop.permute.xlu0 %99
    %103 = vset.pattern.permute.xlu0 0
    %104 = vperm.xlu0 %103, %v70
    %v105 = vpop.permute.xlu0 %104
    %108 = vset.pattern.permute.xlu0 0
    %109 = vperm.xlu0 %108, %v71
    %v110 = vpop.permute.xlu0 %109
    %113 = vset.pattern.permute.xlu0 0
    %114 = vperm.xlu0 %113, %v72
    %v115 = vpop.permute.xlu0 %114
    %118 = vset.pattern.permute.xlu0 0
    %119 = vperm.xlu0 %118, %v73
    %v120 = vpop.permute.xlu0 %119
    %123 = vset.pattern.permute.xlu0 0
    %124 = vperm.xlu0 %123, %v74
    %v125 = vpop.permute.xlu0 %124
    %128 = vset.pattern.permute.xlu0 0
    %129 = vperm.xlu0 %128, %v75
    %v130 = vpop.permute.xlu0 %129
    %133 = vset.pattern.permute.xlu0 0
    %134 = vperm.xlu0 %133, %v76
    %v135 = vpop.permute.xlu0 %134
    %138 = vset.pattern.permute.xlu0 0
    %139 = vperm.xlu0 %138, %v77
    %v140 = vpop.permute.xlu0 %139
    %143 = vset.pattern.permute.xlu0 0
    %144 = vperm.xlu0 %143, %v78
    %v145 = vpop.permute.xlu0 %144
    %148 = vset.pattern.permute.xlu0 0
    %149 = vperm.xlu0 %148, %v79
    %v150 = vpop.permute.xlu0 %149
    %153 = vset.pattern.permute.xlu0 0
    %154 = vperm.xlu0 %153, %v80
    %v155 = vpop.permute.xlu0 %154
    %158 = vset.pattern.permute.xlu0 0
    %159 = vperm.xlu0 %158, %v81
    %v160 = vpop.permute.xlu0 %159
    %v178 = vunpack.c.l.b16 %v50
    %v179 = vunpack.c.l.b16 %v51
    %v180 = vunpack.c.l.b16 %v52
    %v181 = vunpack.c.l.b16 %v53
    %v182 = vunpack.c.l.b16 %v54
    %v183 = vunpack.c.l.b16 %v55
    %v184 = vunpack.c.l.b16 %v56
    %v185 = vunpack.c.l.b16 %v57
    %v186 = vunpack.c.l.b16 %v58
    %v187 = vunpack.c.l.b16 %v59
    %v188 = vunpack.c.l.b16 %v60
    %v189 = vunpack.c.l.b16 %v61
    %v190 = vunpack.c.l.b16 %v62
    %v191 = vunpack.c.l.b16 %v63
    %v192 = vunpack.c.l.b16 %v64
    %v193 = vunpack.c.l.b16 %v65
    %v194 = vpack.c.b16 %v179, %v178
    %v195 = vpack.c.b16 %v181, %v180
    %v196 = vpack.c.b16 %v183, %v182
    %v197 = vpack.c.b16 %v185, %v184
    %v198 = vpack.c.b16 %v187, %v186
    %v199 = vpack.c.b16 %v189, %v188
    %v200 = vpack.c.b16 %v191, %v190
    %v201 = vpack.c.b16 %v193, %v192
    %v203 = vunpack.c.l.b16 %v49
    %v204 = vunpack.c.h.b16 %v49
    %v205 = vpack.c.b16 %v203, %v203
    %v206 = vpack.c.b16 %v204, %v204
    %vm207 = vcmask 64512
    %v209 = vsel %vm207, %v194, 0
    %v212 = vsel %vm207, %v195, 0
    %v215 = vsel %vm207, %v196, 0
    %v218 = vsel %vm207, %v197, 0
    %v221 = vsel %vm207, %v198, 0
    %v224 = vsel %vm207, %v199, 0
    %v227 = vsel %vm207, %v200, 0
    %v230 = vsel %vm207, %v201, 0
    %vm232 = vcmask 1043456
    %v234 = vsel %vm232, %v205, 0
    %v237 = vsel %vm232, %v206, 0
    %239 = vmatprep.subr.bf16.mxu0 %v237
    %240 = vmatpush1.bf16.msra.mxu0 %v234
    %241 = vmatprep.subr.bf16.mxu0 0
    %242 = vmatpush1.bf16.msra.mxu0 0
    %243 = vmatprep.subr.bf16.mxu0 0
    %244 = vmatpush1.bf16.msra.mxu0 0
    %245 = vmatprep.subr.bf16.mxu0 0
    %246 = vmatpush1.bf16.msra.mxu0 0
    %247 = vmatprep.subr.bf16.mxu0 0
    %248 = vmatpush1.bf16.msra.mxu0 0
    %249 = vmatprep.subr.bf16.mxu0 0
    %250 = vmatpush1.bf16.msra.mxu0 0
    %251 = vmatprep.subr.bf16.mxu0 0
    %252 = vmatpush1.bf16.msra.mxu0 0
    %253 = vmatprep.subr.bf16.mxu0 0
    %254 = vmatpush1.bf16.msra.mxu0 0
    %255 = vmatprep.subr.bf16.mxu0 0
    %256 = vmatpush1.bf16.msra.mxu0 0
    %257 = vmatprep.subr.bf16.mxu0 0
    %258 = vmatpush1.bf16.msra.mxu0 0
    %259 = vmatprep.subr.bf16.mxu0 0
    %260 = vmatpush1.bf16.msra.mxu0 0
    %261 = vmatprep.subr.bf16.mxu0 0
    %262 = vmatpush1.bf16.msra.mxu0 0
    %263 = vmatprep.subr.bf16.mxu0 0
    %264 = vmatpush1.bf16.msra.mxu0 0
    %265 = vmatprep.subr.bf16.mxu0 0
    %266 = vmatpush1.bf16.msra.mxu0 0
    %267 = vmatprep.subr.bf16.mxu0 0
    %268 = vmatpush1.bf16.msra.mxu0 0
    %269 = vmatprep.subr.bf16.mxu0 0
    %270 = vmatpush1.bf16.msra.mxu0 0
    %271 = vmatprep.mubr.bf16.mxu0 0
    %272 = vmatmul.mubr.bf16.gmra.mrb[0].mxu0 %v209
    %v273 = vpop.f32.mrb[0].mxu0
    %v274 = vadd.f32 %v85, %v273
    %v275 = vpop.f32.mrb[0].mxu0
    %v276 = vadd.f32 %v85, %v275
    %v277 = vpop.f32.mrb[0].mxu0
    %v278 = vadd.f32 %v90, %v277
    %v279 = vpop.f32.mrb[0].mxu0
    %v280 = vadd.f32 %v90, %v279
    %281 = vmatprep.mubr.bf16.mxu0 0
    %282 = vmatmul.mubr.bf16.gmra.mrb[0].mxu0 %v212
    %v283 = vpop.f32.mrb[0].mxu0
    %v284 = vadd.f32 %v95, %v283
    %v285 = vpop.f32.mrb[0].mxu0
    %v286 = vadd.f32 %v95, %v285
    %v287 = vpop.f32.mrb[0].mxu0
    %v288 = vadd.f32 %v100, %v287
    %v289 = vpop.f32.mrb[0].mxu0
    %v290 = vadd.f32 %v100, %v289
    %291 = vmatprep.mubr.bf16.mxu0 0
    %292 = vmatmul.mubr.bf16.gmra.mrb[0].mxu0 %v215
    %v293 = vpop.f32.mrb[0].mxu0
    %v294 = vadd.f32 %v105, %v293
    %v295 = vpop.f32.mrb[0].mxu0
    %v296 = vadd.f32 %v105, %v295
    %v297 = vpop.f32.mrb[0].mxu0
    %v298 = vadd.f32 %v110, %v297
    %v299 = vpop.f32.mrb[0].mxu0
    %v300 = vadd.f32 %v110, %v299
    %301 = vmatprep.mubr.bf16.mxu0 0
    %302 = vmatmul.mubr.bf16.gmra.mrb[0].mxu0 %v218
    %v303 = vpop.f32.mrb[0].mxu0
    %v304 = vadd.f32 %v115, %v303
    %v305 = vpop.f32.mrb[0].mxu0
    %v306 = vadd.f32 %v115, %v305
    %v307 = vpop.f32.mrb[0].mxu0
    %v308 = vadd.f32 %v120, %v307
    %v309 = vpop.f32.mrb[0].mxu0
    %v310 = vadd.f32 %v120, %v309
    %311 = vmatprep.mubr.bf16.mxu0 0
    %312 = vmatmul.mubr.bf16.gmra.mrb[0].mxu0 %v221
    %v313 = vpop.f32.mrb[0].mxu0
    %v314 = vadd.f32 %v125, %v313
    %v315 = vpop.f32.mrb[0].mxu0
    %v316 = vadd.f32 %v125, %v315
    %v317 = vpop.f32.mrb[0].mxu0
    %v318 = vadd.f32 %v130, %v317
    %v319 = vpop.f32.mrb[0].mxu0
    %v320 = vadd.f32 %v130, %v319
    %321 = vmatprep.mubr.bf16.mxu0 0
    %322 = vmatmul.mubr.bf16.gmra.mrb[0].mxu0 %v224
    %v323 = vpop.f32.mrb[0].mxu0
    %v324 = vadd.f32 %v135, %v323
    %v325 = vpop.f32.mrb[0].mxu0
    %v326 = vadd.f32 %v135, %v325
    %v327 = vpop.f32.mrb[0].mxu0
    %v328 = vadd.f32 %v140, %v327
    %v329 = vpop.f32.mrb[0].mxu0
    %v330 = vadd.f32 %v140, %v329
    %331 = vmatprep.mubr.bf16.mxu0 0
    %332 = vmatmul.mubr.bf16.gmra.mrb[0].mxu0 %v227
    %v333 = vpop.f32.mrb[0].mxu0
    %v334 = vadd.f32 %v145, %v333
    %v335 = vpop.f32.mrb[0].mxu0
    %v336 = vadd.f32 %v145, %v335
    %v337 = vpop.f32.mrb[0].mxu0
    %v338 = vadd.f32 %v150, %v337
    %v339 = vpop.f32.mrb[0].mxu0
    %v340 = vadd.f32 %v150, %v339
    %341 = vmatprep.mubr.bf16.mxu0 0
    %342 = vmatmul.mubr.bf16.gmra.mrb[0].mxu0 %v230
    %v343 = vpop.f32.mrb[0].mxu0
    %v344 = vadd.f32 %v155, %v343
    %v345 = vpop.f32.mrb[0].mxu0
    %v346 = vadd.f32 %v155, %v345
    %v347 = vpop.f32.mrb[0].mxu0
    %v348 = vadd.f32 %v160, %v347
    %v349 = vpop.f32.mrb[0].mxu0
    %v350 = vadd.f32 %v160, %v349
    %351 = vdwg.mxu0
    %v352 = vmax.f32 %v274, 0.0
    %v353 = vmax.f32 %v276, 0.0
    %v354 = vmax.f32 %v278, 0.0
    %v355 = vmax.f32 %v280, 0.0
    %v356 = vmax.f32 %v284, 0.0
    %v357 = vmax.f32 %v286, 0.0
    %v358 = vmax.f32 %v288, 0.0
    %v359 = vmax.f32 %v290, 0.0
    %v360 = vmax.f32 %v294, 0.0
    %v361 = vmax.f32 %v296, 0.0
    %v362 = vmax.f32 %v298, 0.0
    %v363 = vmax.f32 %v300, 0.0
    %v364 = vmax.f32 %v304, 0.0
    %v365 = vmax.f32 %v306, 0.0
    %v366 = vmax.f32 %v308, 0.0
    %v367 = vmax.f32 %v310, 0.0
    %v368 = vmax.f32 %v314, 0.0
    %v369 = vmax.f32 %v316, 0.0
    %v370 = vmax.f32 %v318, 0.0
    %v371 = vmax.f32 %v320, 0.0
    %v372 = vmax.f32 %v324, 0.0
    %v373 = vmax.f32 %v326, 0.0
    %v374 = vmax.f32 %v328, 0.0
    %v375 = vmax.f32 %v330, 0.0
    %v376 = vmax.f32 %v334, 0.0
    %v377 = vmax.f32 %v336, 0.0
    %v378 = vmax.f32 %v338, 0.0
    %v379 = vmax.f32 %v340, 0.0
    %v380 = vmax.f32 %v344, 0.0
    %v381 = vmax.f32 %v346, 0.0
    %v382 = vmax.f32 %v348, 0.0
    %v383 = vmax.f32 %v350, 0.0
    %v384 = vpack.c.bf16 %v354, %v352
    %v385 = vpack.c.bf16 %v355, %v353
    %v386 = vpack.c.bf16 %v358, %v356
    %v387 = vpack.c.bf16 %v359, %v357
    %v388 = vpack.c.bf16 %v362, %v360
    %v389 = vpack.c.bf16 %v363, %v361
    %v390 = vpack.c.bf16 %v366, %v364
    %v391 = vpack.c.bf16 %v367, %v365
    %v392 = vpack.c.bf16 %v370, %v368
    %v393 = vpack.c.bf16 %v371, %v369
    %v394 = vpack.c.bf16 %v374, %v372
    %v395 = vpack.c.bf16 %v375, %v373
    %v396 = vpack.c.bf16 %v378, %v376
    %v397 = vpack.c.bf16 %v379, %v377
    %v398 = vpack.c.bf16 %v382, %v380
    %v399 = vpack.c.bf16 %v383, %v381
    %v400 = vld [vmem:[%s3] sm:$0xf]
    %v401 = vld [vmem:[%s3 + $0x4] sm:$0xf]
    %v402 = vld [vmem:[%s3 + $0x8] sm:$0xf]
    %v403 = vld [vmem:[%s3 + $0xc] sm:$0xf]
    %v404 = vld [vmem:[%s3 + $0x10] sm:$0xf]
    %v405 = vld [vmem:[%s3 + $0x14] sm:$0xf]
    %v406 = vld [vmem:[%s3 + $0x18] sm:$0xf]
    %v407 = vld [vmem:[%s3 + $0x1c] sm:$0xf]
    %v408 = vld [vmem:[%s4] sm:$0xff]
    %v409 = vld [vmem:[%s4 + $0x8] sm:$0xff]
    %v410 = vld [vmem:[%s4 + $0x10] sm:$0xff]
    %v411 = vld [vmem:[%s4 + $0x18] sm:$0xff]
    %v412 = vld [vmem:[%s4 + $0x20] sm:$0xff]
    %v413 = vld [vmem:[%s4 + $0x28] sm:$0xff]
    %v414 = vld [vmem:[%s4 + $0x30] sm:$0xff]
    %v415 = vld [vmem:[%s4 + $0x38] sm:$0xff]
    %417 = vset.pattern.permute.xlu0 0
    %418 = vperm.xlu0 %417, %v408
    %v419 = vpop.permute.xlu0 %418
    %422 = vset.pattern.permute.xlu0 0
    %423 = vperm.xlu0 %422, %v409
    %v424 = vpop.permute.xlu0 %423
    %427 = vset.pattern.permute.xlu0 0
    %428 = vperm.xlu0 %427, %v410
    %v429 = vpop.permute.xlu0 %428
    %432 = vset.pattern.permute.xlu0 0
    %433 = vperm.xlu0 %432, %v411
    %v434 = vpop.permute.xlu0 %433
    %437 = vset.pattern.permute.xlu0 0
    %438 = vperm.xlu0 %437, %v412
    %v439 = vpop.permute.xlu0 %438
    %442 = vset.pattern.permute.xlu0 0
    %443 = vperm.xlu0 %442, %v413
    %v444 = vpop.permute.xlu0 %443
    %447 = vset.pattern.permute.xlu0 0
    %448 = vperm.xlu0 %447, %v414
    %v449 = vpop.permute.xlu0 %448
    %452 = vset.pattern.permute.xlu0 0
    %453 = vperm.xlu0 %452, %v415
    %v454 = vpop.permute.xlu0 %453
    %v464 = vunpack.c.l.b16 %v400
    %v465 = vunpack.c.l.b16 %v401
    %v466 = vunpack.c.l.b16 %v402
    %v467 = vunpack.c.l.b16 %v403
    %v468 = vunpack.c.l.b16 %v404
    %v469 = vunpack.c.l.b16 %v405
    %v470 = vunpack.c.l.b16 %v406
    %v471 = vunpack.c.l.b16 %v407
    %v472 = vpack.c.b16 %v465, %v464
    %v473 = vpack.c.b16 %v467, %v466
    %v474 = vpack.c.b16 %v469, %v468
    %v475 = vpack.c.b16 %v471, %v470
    %480 = vmatprep.subr.bf16.mxu0 %v385
    %481 = vmatpush1.bf16.msra.mxu0 %v384
    %482 = vmatprep.subr.bf16.mxu0 %v387
    %483 = vmatpush1.bf16.msra.mxu0 %v386
    %484 = vmatprep.subr.bf16.mxu0 %v389
    %485 = vmatpush1.bf16.msra.mxu0 %v388
    %486 = vmatprep.subr.bf16.mxu0 %v391
    %487 = vmatpush1.bf16.msra.mxu0 %v390
    %488 = vmatprep.subr.bf16.mxu0 %v393
    %489 = vmatpush1.bf16.msra.mxu0 %v392
    %490 = vmatprep.subr.bf16.mxu0 %v395
    %491 = vmatpush1.bf16.msra.mxu0 %v394
    %492 = vmatprep.subr.bf16.mxu0 %v397
    %493 = vmatpush1.bf16.msra.mxu0 %v396
    %494 = vmatprep.subr.bf16.mxu0 %v399
    %495 = vmatpush1.bf16.msra.mxu0 %v398
    %496 = vmatprep.subr.bf16.mxu0 0
    %497 = vmatpush1.bf16.msra.mxu0 0
    %498 = vmatprep.subr.bf16.mxu0 0
    %499 = vmatpush1.bf16.msra.mxu0 0
    %500 = vmatprep.subr.bf16.mxu0 0
    %501 = vmatpush1.bf16.msra.mxu0 0
    %502 = vmatprep.subr.bf16.mxu0 0
    %503 = vmatpush1.bf16.msra.mxu0 0
    %504 = vmatprep.subr.bf16.mxu0 0
    %505 = vmatpush1.bf16.msra.mxu0 0
    %506 = vmatprep.subr.bf16.mxu0 0
    %507 = vmatpush1.bf16.msra.mxu0 0
    %508 = vmatprep.subr.bf16.mxu0 0
    %509 = vmatpush1.bf16.msra.mxu0 0
    %510 = vmatprep.subr.bf16.mxu0 0
    %511 = vmatpush1.bf16.msra.mxu0 0
    %512 = vmatprep.mubr.bf16.mxu0 0
    %513 = vmatmul.mubr.bf16.gmra.mrb[0].mxu0 %v472
    %v514 = vpop.f32.mrb[0].mxu0
    %v515 = vadd.f32 %v419, %v514
    %v516 = vpop.f32.mrb[0].mxu0
    %v517 = vadd.f32 %v419, %v516
    %v518 = vpop.f32.mrb[0].mxu0
    %v519 = vadd.f32 %v424, %v518
    %v520 = vpop.f32.mrb[0].mxu0
    %v521 = vadd.f32 %v424, %v520
    %522 = vmatprep.mubr.bf16.mxu0 0
    %523 = vmatmul.mubr.bf16.gmra.mrb[0].mxu0 %v473
    %v524 = vpop.f32.mrb[0].mxu0
    %v525 = vadd.f32 %v429, %v524
    %v526 = vpop.f32.mrb[0].mxu0
    %v527 = vadd.f32 %v429, %v526
    %v528 = vpop.f32.mrb[0].mxu0
    %v529 = vadd.f32 %v434, %v528
    %v530 = vpop.f32.mrb[0].mxu0
    %v531 = vadd.f32 %v434, %v530
    %532 = vmatprep.mubr.bf16.mxu0 0
    %533 = vmatmul.mubr.bf16.gmra.mrb[0].mxu0 %v474
    %v534 = vpop.f32.mrb[0].mxu0
    %v535 = vadd.f32 %v439, %v534
    %v536 = vpop.f32.mrb[0].mxu0
    %v537 = vadd.f32 %v439, %v536
    %v538 = vpop.f32.mrb[0].mxu0
    %v539 = vadd.f32 %v444, %v538
    %v540 = vpop.f32.mrb[0].mxu0
    %v541 = vadd.f32 %v444, %v540
    %542 = vmatprep.mubr.bf16.mxu0 0
    %543 = vmatmul.mubr.bf16.gmra.mrb[0].mxu0 %v475
    %v544 = vpop.f32.mrb[0].mxu0
    %v545 = vadd.f32 %v449, %v544
    %v546 = vpop.f32.mrb[0].mxu0
    %v547 = vadd.f32 %v449, %v546
    %v548 = vpop.f32.mrb[0].mxu0
    %v549 = vadd.f32 %v454, %v548
    %v550 = vpop.f32.mrb[0].mxu0
    %v551 = vadd.f32 %v454, %v550
    %552 = vdwg.mxu0
    %v553 = vmax.f32 %v515, 0.0
    %v554 = vmax.f32 %v517, 0.0
    %v555 = vmax.f32 %v519, 0.0
    %v556 = vmax.f32 %v521, 0.0
    %v557 = vmax.f32 %v525, 0.0
    %v558 = vmax.f32 %v527, 0.0
    %v559 = vmax.f32 %v529, 0.0
    %v560 = vmax.f32 %v531, 0.0
    %v561 = vmax.f32 %v535, 0.0
    %v562 = vmax.f32 %v537, 0.0
    %v563 = vmax.f32 %v539, 0.0
    %v564 = vmax.f32 %v541, 0.0
    %v565 = vmax.f32 %v545, 0.0
    %v566 = vmax.f32 %v547, 0.0
    %v567 = vmax.f32 %v549, 0.0
    %v568 = vmax.f32 %v551, 0.0
    %v569 = vpack.c.bf16 %v555, %v553
    %v570 = vpack.c.bf16 %v556, %v554
    %v571 = vpack.c.bf16 %v559, %v557
    %v572 = vpack.c.bf16 %v560, %v558
    %v573 = vpack.c.bf16 %v563, %v561
    %v574 = vpack.c.bf16 %v564, %v562
    %v575 = vpack.c.bf16 %v567, %v565
    %v576 = vpack.c.bf16 %v568, %v566
    %v577 = vld [vmem:[%s5] sm:$0xf]
    %v578 = vld [vmem:[%s5 + $0x4] sm:$0xf]
    %v579 = vld [vmem:[%s5 + $0x8] sm:$0xf]
    %v580 = vld [vmem:[%s5 + $0xc] sm:$0xf]
    %v581 = vld [vmem:[%s6] sm:$0xff]
    %v582 = vld [vmem:[%s6 + $0x8] sm:$0xff]
    %v583 = vld [vmem:[%s6 + $0x10] sm:$0xff]
    %v584 = vld [vmem:[%s6 + $0x18] sm:$0xff]
    %586 = vset.pattern.permute.xlu0 0
    %587 = vperm.xlu0 %586, %v581
    %v588 = vpop.permute.xlu0 %587
    %591 = vset.pattern.permute.xlu0 0
    %592 = vperm.xlu0 %591, %v582
    %v593 = vpop.permute.xlu0 %592
    %596 = vset.pattern.permute.xlu0 0
    %597 = vperm.xlu0 %596, %v583
    %v598 = vpop.permute.xlu0 %597
    %601 = vset.pattern.permute.xlu0 0
    %602 = vperm.xlu0 %601, %v584
    %v603 = vpop.permute.xlu0 %602
    %v609 = vunpack.c.l.b16 %v577
    %v610 = vunpack.c.l.b16 %v578
    %v611 = vunpack.c.l.b16 %v579
    %v612 = vunpack.c.l.b16 %v580
    %v613 = vpack.c.b16 %v610, %v609
    %v614 = vpack.c.b16 %v612, %v611
    %vm615 = vcmask 523264
    %v617 = vsel %vm615, %v613, 0
    %v620 = vsel %vm615, %v614, 0
    %622 = vmatprep.subr.bf16.mxu0 %v570
    %623 = vmatpush1.bf16.msra.mxu0 %v569
    %624 = vmatprep.subr.bf16.mxu0 %v572
    %625 = vmatpush1.bf16.msra.mxu0 %v571
    %626 = vmatprep.subr.bf16.mxu0 %v574
    %627 = vmatpush1.bf16.msra.mxu0 %v573
    %628 = vmatprep.subr.bf16.mxu0 %v576
    %629 = vmatpush1.bf16.msra.mxu0 %v575
    %630 = vmatprep.subr.bf16.mxu0 0
    %631 = vmatpush1.bf16.msra.mxu0 0
    %632 = vmatprep.subr.bf16.mxu0 0
    %633 = vmatpush1.bf16.msra.mxu0 0
    %634 = vmatprep.subr.bf16.mxu0 0
    %635 = vmatpush1.bf16.msra.mxu0 0
    %636 = vmatprep.subr.bf16.mxu0 0
    %637 = vmatpush1.bf16.msra.mxu0 0
    %638 = vmatprep.subr.bf16.mxu0 0
    %639 = vmatpush1.bf16.msra.mxu0 0
    %640 = vmatprep.subr.bf16.mxu0 0
    %641 = vmatpush1.bf16.msra.mxu0 0
    %642 = vmatprep.subr.bf16.mxu0 0
    %643 = vmatpush1.bf16.msra.mxu0 0
    %644 = vmatprep.subr.bf16.mxu0 0
    %645 = vmatpush1.bf16.msra.mxu0 0
    %646 = vmatprep.subr.bf16.mxu0 0
    %647 = vmatpush1.bf16.msra.mxu0 0
    %648 = vmatprep.subr.bf16.mxu0 0
    %649 = vmatpush1.bf16.msra.mxu0 0
    %650 = vmatprep.subr.bf16.mxu0 0
    %651 = vmatpush1.bf16.msra.mxu0 0
    %652 = vmatprep.subr.bf16.mxu0 0
    %653 = vmatpush1.bf16.msra.mxu0 0
    %654 = vmatprep.mubr.bf16.mxu0 0
    %655 = vmatmul.mubr.bf16.gmra.mrb[0].mxu0 %v617
    %v656 = vpop.f32.mrb[0].mxu0
    %v657 = vadd.f32 %v588, %v656
    %v658 = vpop.f32.mrb[0].mxu0
    %v659 = vadd.f32 %v588, %v658
    %v660 = vpop.f32.mrb[0].mxu0
    %v661 = vadd.f32 %v593, %v660
    %v662 = vpop.f32.mrb[0].mxu0
    %v663 = vadd.f32 %v593, %v662
    %664 = vmatprep.mubr.bf16.mxu0 0
    %665 = vmatmul.mubr.bf16.gmra.mrb[0].mxu0 %v620
    %v666 = vpop.f32.mrb[0].mxu0
    %v667 = vadd.f32 %v598, %v666
    %v668 = vpop.f32.mrb[0].mxu0
    %v669 = vadd.f32 %v598, %v668
    %v670 = vpop.f32.mrb[0].mxu0
    %v671 = vadd.f32 %v603, %v670
    %v672 = vpop.f32.mrb[0].mxu0
    %v673 = vadd.f32 %v603, %v672
    %674 = vdwg.mxu0
    %v675 = vpack.c.bf16 %v661, %v657
    %v676 = vpack.c.bf16 %v663, %v659
    %v677 = vpack.c.bf16 %v671, %v667
    %v678 = vpack.c.bf16 %v673, %v669
    %v683 = vunpack.c.l.b16 %v675
    %v684 = vunpack.c.l.b16 %v676
    %v685 = vunpack.c.h.b16 %v675
    %v686 = vunpack.c.h.b16 %v676
    %v687 = vunpack.c.l.b16 %v677
    %v688 = vunpack.c.l.b16 %v678
    %v689 = vunpack.c.h.b16 %v677
    %v690 = vunpack.c.h.b16 %v678
    %v691 = vpack.c.b16 %v684, %v683
    %v692 = vpack.c.b16 %v686, %v685
    %v693 = vpack.c.b16 %v688, %v687
    %v694 = vpack.c.b16 %v690, %v689
    %699 = vst [vmem:[#allocation2] sm:$0xff] %v691
    %700 = vst [vmem:[#allocation2 + $0x8] sm:$0xff] %v692
    %701 = vst [vmem:[#allocation2 + $0x10] sm:$0xff] %v693
    %702 = vst [vmem:[#allocation2 + $0x18] sm:$0xff] %v694
    %v703 = vld [vmem:[%s7] sm:$0xf]
    %v704 = vld [vmem:[%s7 + $0x4] sm:$0xf]
    %v705 = vld [vmem:[%s7 + $0x8] sm:$0xf]
    %v706 = vld [vmem:[%s7 + $0xc] sm:$0xf]
    %v707 = vld [vmem:[%s7 + $0x10] sm:$0xf]
    %v708 = vld [vmem:[%s7 + $0x14] sm:$0xf]
    %v709 = vld [vmem:[%s7 + $0x18] sm:$0xf]
    %v710 = vld [vmem:[%s7 + $0x1c] sm:$0xf]
    %v711 = vld [vmem:[%s8] sm:$0xff]
    %v712 = vld [vmem:[%s8 + $0x8] sm:$0xff]
    %v713 = vld [vmem:[%s8 + $0x10] sm:$0xff]
    %v714 = vld [vmem:[%s8 + $0x18] sm:$0xff]
    %v715 = vld [vmem:[%s8 + $0x20] sm:$0xff]
    %v716 = vld [vmem:[%s8 + $0x28] sm:$0xff]
    %v717 = vld [vmem:[%s8 + $0x30] sm:$0xff]
    %v718 = vld [vmem:[%s8 + $0x38] sm:$0xff]
    %720 = vset.pattern.permute.xlu0 0
    %721 = vperm.xlu0 %720, %v711
    %v722 = vpop.permute.xlu0 %721
    %725 = vset.pattern.permute.xlu0 0
    %726 = vperm.xlu0 %725, %v712
    %v727 = vpop.permute.xlu0 %726
    %730 = vset.pattern.permute.xlu0 0
    %731 = vperm.xlu0 %730, %v713
    %v732 = vpop.permute.xlu0 %731
    %735 = vset.pattern.permute.xlu0 0
    %736 = vperm.xlu0 %735, %v714
    %v737 = vpop.permute.xlu0 %736
    %740 = vset.pattern.permute.xlu0 0
    %741 = vperm.xlu0 %740, %v715
    %v742 = vpop.permute.xlu0 %741
    %745 = vset.pattern.permute.xlu0 0
    %746 = vperm.xlu0 %745, %v716
    %v747 = vpop.permute.xlu0 %746
    %750 = vset.pattern.permute.xlu0 0
    %751 = vperm.xlu0 %750, %v717
    %v752 = vpop.permute.xlu0 %751
    %755 = vset.pattern.permute.xlu0 0
    %756 = vperm.xlu0 %755, %v718
    %v757 = vpop.permute.xlu0 %756
    %v767 = vunpack.c.l.b16 %v703
    %v768 = vunpack.c.l.b16 %v704
    %v769 = vunpack.c.l.b16 %v705
    %v770 = vunpack.c.l.b16 %v706
    %v771 = vunpack.c.l.b16 %v707
    %v772 = vunpack.c.l.b16 %v708
    %v773 = vunpack.c.l.b16 %v709
    %v774 = vunpack.c.l.b16 %v710
    %v775 = vpack.c.b16 %v768, %v767
    %v776 = vpack.c.b16 %v770, %v769
    %v777 = vpack.c.b16 %v772, %v771
    %v778 = vpack.c.b16 %v774, %v773
    %vm779 = vcmask 261120
    %v781 = vsel %vm779, %v775, 0
    %v784 = vsel %vm779, %v776, 0
    %v787 = vsel %vm779, %v777, 0
    %v790 = vsel %vm779, %v778, 0
    %792 = vmatprep.subr.bf16.mxu0 %v676
    %793 = vmatpush1.bf16.msra.mxu0 %v675
    %794 = vmatprep.subr.bf16.mxu0 %v678
    %795 = vmatpush1.bf16.msra.mxu0 %v677
    %796 = vmatprep.subr.bf16.mxu0 0
    %797 = vmatpush1.bf16.msra.mxu0 0
    %798 = vmatprep.subr.bf16.mxu0 0
    %799 = vmatpush1.bf16.msra.mxu0 0
    %800 = vmatprep.subr.bf16.mxu0 0
    %801 = vmatpush1.bf16.msra.mxu0 0
    %802 = vmatprep.subr.bf16.mxu0 0
    %803 = vmatpush1.bf16.msra.mxu0 0
    %804 = vmatprep.subr.bf16.mxu0 0
    %805 = vmatpush1.bf16.msra.mxu0 0
    %806 = vmatprep.subr.bf16.mxu0 0
    %807 = vmatpush1.bf16.msra.mxu0 0
    %808 = vmatprep.subr.bf16.mxu0 0
    %809 = vmatpush1.bf16.msra.mxu0 0
    %810 = vmatprep.subr.bf16.mxu0 0
    %811 = vmatpush1.bf16.msra.mxu0 0
    %812 = vmatprep.subr.bf16.mxu0 0
    %813 = vmatpush1.bf16.msra.mxu0 0
    %814 = vmatprep.subr.bf16.mxu0 0
    %815 = vmatpush1.bf16.msra.mxu0 0
    %816 = vmatprep.subr.bf16.mxu0 0
    %817 = vmatpush1.bf16.msra.mxu0 0
    %818 = vmatprep.subr.bf16.mxu0 0
    %819 = vmatpush1.bf16.msra.mxu0 0
    %820 = vmatprep.subr.bf16.mxu0 0
    %821 = vmatpush1.bf16.msra.mxu0 0
    %822 = vmatprep.subr.bf16.mxu0 0
    %823 = vmatpush1.bf16.msra.mxu0 0
    %824 = vmatprep.mubr.bf16.mxu0 0
    %825 = vmatmul.mubr.bf16.gmra.mrb[0].mxu0 %v781
    %v826 = vpop.f32.mrb[0].mxu0
    %v827 = vadd.f32 %v722, %v826
    %v828 = vpop.f32.mrb[0].mxu0
    %v829 = vadd.f32 %v722, %v828
    %v830 = vpop.f32.mrb[0].mxu0
    %v831 = vadd.f32 %v727, %v830
    %v832 = vpop.f32.mrb[0].mxu0
    %v833 = vadd.f32 %v727, %v832
    %834 = vmatprep.mubr.bf16.mxu0 0
    %835 = vmatmul.mubr.bf16.gmra.mrb[0].mxu0 %v784
    %v836 = vpop.f32.mrb[0].mxu0
    %v837 = vadd.f32 %v732, %v836
    %v838 = vpop.f32.mrb[0].mxu0
    %v839 = vadd.f32 %v732, %v838
    %v840 = vpop.f32.mrb[0].mxu0
    %v841 = vadd.f32 %v737, %v840
    %v842 = vpop.f32.mrb[0].mxu0
    %v843 = vadd.f32 %v737, %v842
    %844 = vmatprep.mubr.bf16.mxu0 0
    %845 = vmatmul.mubr.bf16.gmra.mrb[0].mxu0 %v787
    %v846 = vpop.f32.mrb[0].mxu0
    %v847 = vadd.f32 %v742, %v846
    %v848 = vpop.f32.mrb[0].mxu0
    %v849 = vadd.f32 %v742, %v848
    %v850 = vpop.f32.mrb[0].mxu0
    %v851 = vadd.f32 %v747, %v850
    %v852 = vpop.f32.mrb[0].mxu0
    %v853 = vadd.f32 %v747, %v852
    %854 = vmatprep.mubr.bf16.mxu0 0
    %855 = vmatmul.mubr.bf16.gmra.mrb[0].mxu0 %v790
    %v856 = vpop.f32.mrb[0].mxu0
    %v857 = vadd.f32 %v752, %v856
    %v858 = vpop.f32.mrb[0].mxu0
    %v859 = vadd.f32 %v752, %v858
    %v860 = vpop.f32.mrb[0].mxu0
    %v861 = vadd.f32 %v757, %v860
    %v862 = vpop.f32.mrb[0].mxu0
    %v863 = vadd.f32 %v757, %v862
    %864 = vdwg.mxu0
    %v865 = vmax.f32 %v827, 0.0
    %v866 = vmax.f32 %v829, 0.0
    %v867 = vmax.f32 %v831, 0.0
    %v868 = vmax.f32 %v833, 0.0
    %v869 = vmax.f32 %v837, 0.0
    %v870 = vmax.f32 %v839, 0.0
    %v871 = vmax.f32 %v841, 0.0
    %v872 = vmax.f32 %v843, 0.0
    %v873 = vmax.f32 %v847, 0.0
    %v874 = vmax.f32 %v849, 0.0
    %v875 = vmax.f32 %v851, 0.0
    %v876 = vmax.f32 %v853, 0.0
    %v877 = vmax.f32 %v857, 0.0
    %v878 = vmax.f32 %v859, 0.0
    %v879 = vmax.f32 %v861, 0.0
    %v880 = vmax.f32 %v863, 0.0
    %v881 = vpack.c.bf16 %v867, %v865
    %v882 = vpack.c.bf16 %v868, %v866
    %v883 = vpack.c.bf16 %v871, %v869
    %v884 = vpack.c.bf16 %v872, %v870
    %v885 = vpack.c.bf16 %v875, %v873
    %v886 = vpack.c.bf16 %v876, %v874
    %v887 = vpack.c.bf16 %v879, %v877
    %v888 = vpack.c.bf16 %v880, %v878
    %v889 = vld [vmem:[%s9] sm:$0xf]
    %v890 = vld [vmem:[%s9 + $0x4] sm:$0xf]
    %v891 = vld [vmem:[%s9 + $0x8] sm:$0xf]
    %v892 = vld [vmem:[%s9 + $0xc] sm:$0xf]
    %v893 = vld [vmem:[%s9 + $0x10] sm:$0xf]
    %v894 = vld [vmem:[%s9 + $0x14] sm:$0xf]
    %v895 = vld [vmem:[%s9 + $0x18] sm:$0xf]
    %v896 = vld [vmem:[%s9 + $0x1c] sm:$0xf]
    %v897 = vld [vmem:[%s9 + $0x20] sm:$0xf]
    %v898 = vld [vmem:[%s9 + $0x24] sm:$0xf]
    %v899 = vld [vmem:[%s9 + $0x28] sm:$0xf]
    %v900 = vld [vmem:[%s9 + $0x2c] sm:$0xf]
    %v901 = vld [vmem:[%s9 + $0x30] sm:$0xf]
    %v902 = vld [vmem:[%s9 + $0x34] sm:$0xf]
    %v903 = vld [vmem:[%s9 + $0x38] sm:$0xf]
    %v904 = vld [vmem:[%s9 + $0x3c] sm:$0xf]
    %v905 = vld [vmem:[%s10] sm:$0xff]
    %v906 = vld [vmem:[%s10 + $0x8] sm:$0xff]
    %v907 = vld [vmem:[%s10 + $0x10] sm:$0xff]
    %v908 = vld [vmem:[%s10 + $0x18] sm:$0xff]
    %v909 = vld [vmem:[%s10 + $0x20] sm:$0xff]
    %v910 = vld [vmem:[%s10 + $0x28] sm:$0xff]
    %v911 = vld [vmem:[%s10 + $0x30] sm:$0xff]
    %v912 = vld [vmem:[%s10 + $0x38] sm:$0xff]
    %v913 = vld [vmem:[%s10 + $0x40] sm:$0xff]
    %v914 = vld [vmem:[%s10 + $0x48] sm:$0xff]
    %v915 = vld [vmem:[%s10 + $0x50] sm:$0xff]
    %v916 = vld [vmem:[%s10 + $0x58] sm:$0xff]
    %v917 = vld [vmem:[%s10 + $0x60] sm:$0xff]
    %v918 = vld [vmem:[%s10 + $0x68] sm:$0xff]
    %v919 = vld [vmem:[%s10 + $0x70] sm:$0xff]
    %v920 = vld [vmem:[%s10 + $0x78] sm:$0xff]
    %922 = vset.pattern.permute.xlu0 0
    %923 = vperm.xlu0 %922, %v905
    %v924 = vpop.permute.xlu0 %923
    %927 = vset.pattern.permute.xlu0 0
    %928 = vperm.xlu0 %927, %v906
    %v929 = vpop.permute.xlu0 %928
    %932 = vset.pattern.permute.xlu0 0
    %933 = vperm.xlu0 %932, %v907
    %v934 = vpop.permute.xlu0 %933
    %937 = vset.pattern.permute.xlu0 0
    %938 = vperm.xlu0 %937, %v908
    %v939 = vpop.permute.xlu0 %938
    %942 = vset.pattern.permute.xlu0 0
    %943 = vperm.xlu0 %942, %v909
    %v944 = vpop.permute.xlu0 %943
    %947 = vset.pattern.permute.xlu0 0
    %948 = vperm.xlu0 %947, %v910
    %v949 = vpop.permute.xlu0 %948
    %952 = vset.pattern.permute.xlu0 0
    %953 = vperm.xlu0 %952, %v911
    %v954 = vpop.permute.xlu0 %953
    %957 = vset.pattern.permute.xlu0 0
    %958 = vperm.xlu0 %957, %v912
    %v959 = vpop.permute.xlu0 %958
    %962 = vset.pattern.permute.xlu0 0
    %963 = vperm.xlu0 %962, %v913
    %v964 = vpop.permute.xlu0 %963
    %967 = vset.pattern.permute.xlu0 0
    %968 = vperm.xlu0 %967, %v914
    %v969 = vpop.permute.xlu0 %968
    %972 = vset.pattern.permute.xlu0 0
    %973 = vperm.xlu0 %972, %v915
    %v974 = vpop.permute.xlu0 %973
    %977 = vset.pattern.permute.xlu0 0
    %978 = vperm.xlu0 %977, %v916
    %v979 = vpop.permute.xlu0 %978
    %982 = vset.pattern.permute.xlu0 0
    %983 = vperm.xlu0 %982, %v917
    %v984 = vpop.permute.xlu0 %983
    %987 = vset.pattern.permute.xlu0 0
    %988 = vperm.xlu0 %987, %v918
    %v989 = vpop.permute.xlu0 %988
    %992 = vset.pattern.permute.xlu0 0
    %993 = vperm.xlu0 %992, %v919
    %v994 = vpop.permute.xlu0 %993
    %997 = vset.pattern.permute.xlu0 0
    %998 = vperm.xlu0 %997, %v920
    %v999 = vpop.permute.xlu0 %998
    %v1017 = vunpack.c.l.b16 %v889
    %v1018 = vunpack.c.l.b16 %v890
    %v1019 = vunpack.c.l.b16 %v891
    %v1020 = vunpack.c.l.b16 %v892
    %v1021 = vunpack.c.l.b16 %v893
    %v1022 = vunpack.c.l.b16 %v894
    %v1023 = vunpack.c.l.b16 %v895
    %v1024 = vunpack.c.l.b16 %v896
    %v1025 = vunpack.c.l.b16 %v897
    %v1026 = vunpack.c.l.b16 %v898
    %v1027 = vunpack.c.l.b16 %v899
    %v1028 = vunpack.c.l.b16 %v900
    %v1029 = vunpack.c.l.b16 %v901
    %v1030 = vunpack.c.l.b16 %v902
    %v1031 = vunpack.c.l.b16 %v903
    %v1032 = vunpack.c.l.b16 %v904
    %v1033 = vpack.c.b16 %v1018, %v1017
    %v1034 = vpack.c.b16 %v1020, %v1019
    %v1035 = vpack.c.b16 %v1022, %v1021
    %v1036 = vpack.c.b16 %v1024, %v1023
    %v1037 = vpack.c.b16 %v1026, %v1025
    %v1038 = vpack.c.b16 %v1028, %v1027
    %v1039 = vpack.c.b16 %v1030, %v1029
    %v1040 = vpack.c.b16 %v1032, %v1031
    %v1042 = vsel %vm615, %v1033, 0
    %v1045 = vsel %vm615, %v1034, 0
    %v1048 = vsel %vm615, %v1035, 0
    %v1051 = vsel %vm615, %v1036, 0
    %v1054 = vsel %vm615, %v1037, 0
    %v1057 = vsel %vm615, %v1038, 0
    %v1060 = vsel %vm615, %v1039, 0
    %v1063 = vsel %vm615, %v1040, 0
    %1065 = vmatprep.subr.bf16.mxu0 %v882
    %1066 = vmatpush1.bf16.msra.mxu0 %v881
    %1067 = vmatprep.subr.bf16.mxu0 %v884
    %1068 = vmatpush1.bf16.msra.mxu0 %v883
    %1069 = vmatprep.subr.bf16.mxu0 %v886
    %1070 = vmatpush1.bf16.msra.mxu0 %v885
    %1071 = vmatprep.subr.bf16.mxu0 %v888
    %1072 = vmatpush1.bf16.msra.mxu0 %v887
    %1073 = vmatprep.subr.bf16.mxu0 0
    %1074 = vmatpush1.bf16.msra.mxu0 0
    %1075 = vmatprep.subr.bf16.mxu0 0
    %1076 = vmatpush1.bf16.msra.mxu0 0
    %1077 = vmatprep.subr.bf16.mxu0 0
    %1078 = vmatpush1.bf16.msra.mxu0 0
    %1079 = vmatprep.subr.bf16.mxu0 0
    %1080 = vmatpush1.bf16.msra.mxu0 0
    %1081 = vmatprep.subr.bf16.mxu0 0
    %1082 = vmatpush1.bf16.msra.mxu0 0
    %1083 = vmatprep.subr.bf16.mxu0 0
    %1084 = vmatpush1.bf16.msra.mxu0 0
    %1085 = vmatprep.subr.bf16.mxu0 0
    %1086 = vmatpush1.bf16.msra.mxu0 0
    %1087 = vmatprep.subr.bf16.mxu0 0
    %1088 = vmatpush1.bf16.msra.mxu0 0
    %1089 = vmatprep.subr.bf16.mxu0 0
    %1090 = vmatpush1.bf16.msra.mxu0 0
    %1091 = vmatprep.subr.bf16.mxu0 0
    %1092 = vmatpush1.bf16.msra.mxu0 0
    %1093 = vmatprep.subr.bf16.mxu0 0
    %1094 = vmatpush1.bf16.msra.mxu0 0
    %1095 = vmatprep.subr.bf16.mxu0 0
    %1096 = vmatpush1.bf16.msra.mxu0 0
    %1097 = vmatprep.mubr.bf16.mxu0 0
    %1098 = vmatmul.mubr.bf16.gmra.mrb[0].mxu0 %v1042
    %v1099 = vpop.f32.mrb[0].mxu0
    %v1100 = vadd.f32 %v924, %v1099
    %v1101 = vpop.f32.mrb[0].mxu0
    %v1102 = vadd.f32 %v924, %v1101
    %v1103 = vpop.f32.mrb[0].mxu0
    %v1104 = vadd.f32 %v929, %v1103
    %v1105 = vpop.f32.mrb[0].mxu0
    %v1106 = vadd.f32 %v929, %v1105
    %1107 = vmatprep.mubr.bf16.mxu0 0
    %1108 = vmatmul.mubr.bf16.gmra.mrb[0].mxu0 %v1045
    %v1109 = vpop.f32.mrb[0].mxu0
    %v1110 = vadd.f32 %v934, %v1109
    %v1111 = vpop.f32.mrb[0].mxu0
    %v1112 = vadd.f32 %v934, %v1111
    %v1113 = vpop.f32.mrb[0].mxu0
    %v1114 = vadd.f32 %v939, %v1113
    %v1115 = vpop.f32.mrb[0].mxu0
    %v1116 = vadd.f32 %v939, %v1115
    %1117 = vmatprep.mubr.bf16.mxu0 0
    %1118 = vmatmul.mubr.bf16.gmra.mrb[0].mxu0 %v1048
    %v1119 = vpop.f32.mrb[0].mxu0
    %v1120 = vadd.f32 %v944, %v1119
    %v1121 = vpop.f32.mrb[0].mxu0
    %v1122 = vadd.f32 %v944, %v1121
    %v1123 = vpop.f32.mrb[0].mxu0
    %v1124 = vadd.f32 %v949, %v1123
    %v1125 = vpop.f32.mrb[0].mxu0
    %v1126 = vadd.f32 %v949, %v1125
    %1127 = vmatprep.mubr.bf16.mxu0 0
    %1128 = vmatmul.mubr.bf16.gmra.mrb[0].mxu0 %v1051
    %v1129 = vpop.f32.mrb[0].mxu0
    %v1130 = vadd.f32 %v954, %v1129
    %v1131 = vpop.f32.mrb[0].mxu0
    %v1132 = vadd.f32 %v954, %v1131
    %v1133 = vpop.f32.mrb[0].mxu0
    %v1134 = vadd.f32 %v959, %v1133
    %v1135 = vpop.f32.mrb[0].mxu0
    %v1136 = vadd.f32 %v959, %v1135
    %1137 = vmatprep.mubr.bf16.mxu0 0
    %1138 = vmatmul.mubr.bf16.gmra.mrb[0].mxu0 %v1054
    %v1139 = vpop.f32.mrb[0].mxu0
    %v1140 = vadd.f32 %v964, %v1139
    %v1141 = vpop.f32.mrb[0].mxu0
    %v1142 = vadd.f32 %v964, %v1141
    %v1143 = vpop.f32.mrb[0].mxu0
    %v1144 = vadd.f32 %v969, %v1143
    %v1145 = vpop.f32.mrb[0].mxu0
    %v1146 = vadd.f32 %v969, %v1145
    %1147 = vmatprep.mubr.bf16.mxu0 0
    %1148 = vmatmul.mubr.bf16.gmra.mrb[0].mxu0 %v1057
    %v1149 = vpop.f32.mrb[0].mxu0
    %v1150 = vadd.f32 %v974, %v1149
    %v1151 = vpop.f32.mrb[0].mxu0
    %v1152 = vadd.f32 %v974, %v1151
    %v1153 = vpop.f32.mrb[0].mxu0
    %v1154 = vadd.f32 %v979, %v1153
    %v1155 = vpop.f32.mrb[0].mxu0
    %v1156 = vadd.f32 %v979, %v1155
    %1157 = vmatprep.mubr.bf16.mxu0 0
    %1158 = vmatmul.mubr.bf16.gmra.mrb[0].mxu0 %v1060
    %v1159 = vpop.f32.mrb[0].mxu0
    %v1160 = vadd.f32 %v984, %v1159
    %v1161 = vpop.f32.mrb[0].mxu0
    %v1162 = vadd.f32 %v984, %v1161
    %v1163 = vpop.f32.mrb[0].mxu0
    %v1164 = vadd.f32 %v989, %v1163
    %v1165 = vpop.f32.mrb[0].mxu0
    %v1166 = vadd.f32 %v989, %v1165
    %1167 = vmatprep.mubr.bf16.mxu0 0
    %1168 = vmatmul.mubr.bf16.gmra.mrb[0].mxu0 %v1063
    %v1169 = vpop.f32.mrb[0].mxu0
    %v1170 = vadd.f32 %v994, %v1169
    %v1171 = vpop.f32.mrb[0].mxu0
    %v1172 = vadd.f32 %v994, %v1171
    %v1173 = vpop.f32.mrb[0].mxu0
    %v1174 = vadd.f32 %v999, %v1173
    %v1175 = vpop.f32.mrb[0].mxu0
    %v1176 = vadd.f32 %v999, %v1175
    %1177 = vdwg.mxu0
    %v1178 = vmax.f32 %v1100, 0.0
    %v1179 = vmax.f32 %v1102, 0.0
    %v1180 = vmax.f32 %v1104, 0.0
    %v1181 = vmax.f32 %v1106, 0.0
    %v1182 = vmax.f32 %v1110, 0.0
    %v1183 = vmax.f32 %v1112, 0.0
    %v1184 = vmax.f32 %v1114, 0.0
    %v1185 = vmax.f32 %v1116, 0.0
    %v1186 = vmax.f32 %v1120, 0.0
    %v1187 = vmax.f32 %v1122, 0.0
    %v1188 = vmax.f32 %v1124, 0.0
    %v1189 = vmax.f32 %v1126, 0.0
    %v1190 = vmax.f32 %v1130, 0.0
    %v1191 = vmax.f32 %v1132, 0.0
    %v1192 = vmax.f32 %v1134, 0.0
    %v1193 = vmax.f32 %v1136, 0.0
    %v1194 = vmax.f32 %v1140, 0.0
    %v1195 = vmax.f32 %v1142, 0.0
    %v1196 = vmax.f32 %v1144, 0.0
    %v1197 = vmax.f32 %v1146, 0.0
    %v1198 = vmax.f32 %v1150, 0.0
    %v1199 = vmax.f32 %v1152, 0.0
    %v1200 = vmax.f32 %v1154, 0.0
    %v1201 = vmax.f32 %v1156, 0.0
    %v1202 = vmax.f32 %v1160, 0.0
    %v1203 = vmax.f32 %v1162, 0.0
    %v1204 = vmax.f32 %v1164, 0.0
    %v1205 = vmax.f32 %v1166, 0.0
    %v1206 = vmax.f32 %v1170, 0.0
    %v1207 = vmax.f32 %v1172, 0.0
    %v1208 = vmax.f32 %v1174, 0.0
    %v1209 = vmax.f32 %v1176, 0.0
    %v1210 = vpack.c.bf16 %v1180, %v1178
    %v1211 = vpack.c.bf16 %v1181, %v1179
    %v1212 = vpack.c.bf16 %v1184, %v1182
    %v1213 = vpack.c.bf16 %v1185, %v1183
    %v1214 = vpack.c.bf16 %v1188, %v1186
    %v1215 = vpack.c.bf16 %v1189, %v1187
    %v1216 = vpack.c.bf16 %v1192, %v1190
    %v1217 = vpack.c.bf16 %v1193, %v1191
    %v1218 = vpack.c.bf16 %v1196, %v1194
    %v1219 = vpack.c.bf16 %v1197, %v1195
    %v1220 = vpack.c.bf16 %v1200, %v1198
    %v1221 = vpack.c.bf16 %v1201, %v1199
    %v1222 = vpack.c.bf16 %v1204, %v1202
    %v1223 = vpack.c.bf16 %v1205, %v1203
    %v1224 = vpack.c.bf16 %v1208, %v1206
    %v1225 = vpack.c.bf16 %v1209, %v1207
    %v1226 = vld [vmem:[%s11] sm:$0xf]
    %v1227 = vld [vmem:[%s12] sm:$0xff]
    %1229 = vset.pattern.permute.xlu0 0
    %1230 = vperm.xlu0 %1229, %v1227
    %v1231 = vpop.permute.xlu0 %1230
    %1233 = vmatprep.subr.bf16.mxu0 %v1211
    %1234 = vmatpush1.bf16.msra.mxu0 %v1210
    %1235 = vmatprep.subr.bf16.mxu0 %v1213
    %1236 = vmatpush1.bf16.msra.mxu0 %v1212
    %1237 = vmatprep.subr.bf16.mxu0 %v1215
    %1238 = vmatpush1.bf16.msra.mxu0 %v1214
    %1239 = vmatprep.subr.bf16.mxu0 %v1217
    %1240 = vmatpush1.bf16.msra.mxu0 %v1216
    %1241 = vmatprep.subr.bf16.mxu0 %v1219
    %1242 = vmatpush1.bf16.msra.mxu0 %v1218
    %1243 = vmatprep.subr.bf16.mxu0 %v1221
    %1244 = vmatpush1.bf16.msra.mxu0 %v1220
    %1245 = vmatprep.subr.bf16.mxu0 %v1223
    %1246 = vmatpush1.bf16.msra.mxu0 %v1222
    %1247 = vmatprep.subr.bf16.mxu0 %v1225
    %1248 = vmatpush1.bf16.msra.mxu0 %v1224
    %1249 = vmatprep.subr.bf16.mxu0 0
    %1250 = vmatpush1.bf16.msra.mxu0 0
    %1251 = vmatprep.subr.bf16.mxu0 0
    %1252 = vmatpush1.bf16.msra.mxu0 0
    %1253 = vmatprep.subr.bf16.mxu0 0
    %1254 = vmatpush1.bf16.msra.mxu0 0
    %1255 = vmatprep.subr.bf16.mxu0 0
    %1256 = vmatpush1.bf16.msra.mxu0 0
    %1257 = vmatprep.subr.bf16.mxu0 0
    %1258 = vmatpush1.bf16.msra.mxu0 0
    %1259 = vmatprep.subr.bf16.mxu0 0
    %1260 = vmatpush1.bf16.msra.mxu0 0
    %1261 = vmatprep.subr.bf16.mxu0 0
    %1262 = vmatpush1.bf16.msra.mxu0 0
    %1263 = vmatprep.subr.bf16.mxu0 0
    %1264 = vmatpush1.bf16.msra.mxu0 0
    %1265 = vmatprep.mubr.bf16.mxu0 0
    %1266 = vmatmul.mubr.bf16.gmra.mrb[0].mxu0 %v1226
    %v1267 = vpop.f32.mrb[0].mxu0
    %v1268 = vadd.f32 %v1231, %v1267
    %v1269 = vpop.f32.mrb[0].mxu0
    %v1270 = vadd.f32 %v1231, %v1269
    %v1271 = vpop.f32.mrb[0].mxu0
    %v1272 = vpop.f32.mrb[0].mxu0
    %1273 = vdwg.mxu0
    %v1274 = vpack.c.bf16 %v1268, %v1268
    %v1275 = vpack.c.bf16 %v1270, %v1270
    %v1278 = vunpack.c.l.b16 %v1274
    %v1279 = vunpack.c.l.b16 %v1275
    %v1280 = vpack.c.b16 %v1279, %v1278
    %1282 = vst [vmem:[#allocation4] sm:$0xff] %v1280
    // Predicated region
    $region54: #{tpu_custom_call.1} parent=1 // pred_check
      _
    $region55: #{tpu_custom_call.1} parent=1 // pred_check_branch
      %1284 = sbr.rel (0) target = $region57
    $region56: #{tpu_custom_call.1} parent=1 // pred_region
      %s1286 = ssub.s32 512, 512
      %1287 = vsyncadd [#allocation3], %s1286
      %s1288 = sshll.u32 [#allocation2], 4
      %s1289 = int_to_ptr.vmem [resolvable:$true] %s1288
      %1294 = dma.vmem_to_hbm [thread:$0]  %s1289, 512, %s13, [#allocation3], 128, 128, 8
    $region57: #{tpu_custom_call.1} parent=1 // pred_fallthru
      _
    // Predicated region
    $region58: #{tpu_custom_call.1} parent=1 // pred_check
      _
    $region59: #{tpu_custom_call.1} parent=1 // pred_check_branch
      %1296 = sbr.rel (0) target = $region61
    $region60: #{tpu_custom_call.1} parent=1 // pred_region
      %s1298 = ssub.s32 128, 128
      %1299 = vsyncadd [#allocation5], %s1298
      %s1301 = sshll.u32 [#allocation4], 4
      %s1302 = int_to_ptr.vmem [resolvable:$true] %s1301
      %1304 = dma.vmem_to_hbm [thread:$0]  %s1302, 128, %s14, [#allocation5]
    $region61: #{tpu_custom_call.1} parent=1 // pred_fallthru
      _
    // Predicated region
    $region62: #{tpu_custom_call.1} parent=1 // pred_check
      _
    $region63: #{tpu_custom_call.1} parent=1 // pred_check_branch
      %1306 = sbr.rel (0) target = $region65
    $region64: #{tpu_custom_call.1} parent=1 // pred_region
      %1307 = dma.done [#allocation3], 512
    $region65: #{tpu_custom_call.1} parent=1 // pred_fallthru
      _
    // Predicated region
    $region66: #{tpu_custom_call.1} parent=1 // pred_check
      _
    $region67: #{tpu_custom_call.1} parent=1 // pred_check_branch
      %1309 = sbr.rel (0) target = $region69
    $region68: #{tpu_custom_call.1} parent=1 // pred_region
      %1310 = dma.done [#allocation5], 128
    $region69: #{tpu_custom_call.1} parent=1 // pred_fallthru
      _
    %1311 = vsyncpa [#allocation3], 1
    %1312 = vsyncpa [#allocation5], 1

</llo_original>
